<compile_context>
chip_gen: v5e
topology: v5e:2x2
jax: 0.10.0
libtpu: 0.0.40
codegen_flags: <defaults>
</compile_context>

<pallas_src>
import jax
import jax.numpy as jnp
from jax.experimental import pallas as pl
from jax.experimental.pallas import tpu as pltpu


# Per-block byte budget: big enough to amortize the ~0.35 us per-grid-step
# overhead (>=85% of HBM roofline only needs ~256 KiB blocks), small enough
# that in+out double-buffering (4x) stays well inside every generation's VMEM.
_BLOCK_BYTES = 4 * 1024 * 1024
_VMEM_LIMIT_BYTES = 48 * 1024 * 1024  # below physical VMEM on v5e/v6e/v7x


def init_params():
    key = jax.random.PRNGKey(42)
    kw, kb = jax.random.split(key)
    # PyTorch Linear(1,1): weight [1,1], bias [1], uniform(-b, b), b = 1/sqrt(1)
    tmp_weight = jax.random.uniform(kw, (1, 1), jnp.float32, -1.0, 1.0)
    tmp_bias = jax.random.uniform(kb, (1,), jnp.float32, -1.0, 1.0)
    return {"tmp_weight": tmp_weight, "tmp_bias": tmp_bias}


def _identity_kernel(x_ref, o_ref):
    o_ref[...] = x_ref[...]


def _choose_layout(n, itemsize):
    """Pick a lane-dense (rows, lanes) factorization plus a block row count.

    Returns (rows, lanes, block_rows) or None if no TPU-friendly tiling exists.
    """
    # Packed-sublane multiple: 8 (f32/i32), 16 (bf16/f16), 32 (int8/fp8).
    sublane = 8 * max(1, 4 // itemsize)

    # Widest last dim (multiple of 128) that divides n exactly -> no padding.
    lanes = None
    for cand in (8192, 4096, 2048, 1024, 512, 256, 128):
        if n % cand == 0:
            lanes = cand
            break

    if lanes is None:
        # Whole array as one full-shape block (full dims waive the (8,128)
        # divisibility rule), provided it comfortably fits the VMEM budget.
        if n * itemsize <= _BLOCK_BYTES:
            return 1, n, 1
        return None

    rows = n // lanes
    max_rows = max(1, _BLOCK_BYTES // (lanes * itemsize))
    if rows <= max_rows:
        return rows, lanes, rows  # single full-shape block, grid of 1

    # Largest divisor of `rows` that is <= max_rows and a multiple of the
    # packed-sublane count (keeps every block (sublane, 128)-aligned).
    best = None
    for cand in range(sublane, max_rows + 1, sublane):
        if rows % cand == 0:
            best = cand
    if best is None:
        return None
    return rows, lanes, best


def _identity_copy(x2d, block_rows):
    rows, lanes = x2d.shape
    grid = (rows // block_rows,)
    return pl.pallas_call(
        _identity_kernel,
        out_shape=jax.ShapeDtypeStruct((rows, lanes), x2d.dtype),
        grid_spec=pltpu.PrefetchScalarGridSpec(
            num_scalar_prefetch=0,
            grid=grid,
            in_specs=[pl.BlockSpec((block_rows, lanes), lambda i: (i, 0))],
            out_specs=pl.BlockSpec((block_rows, lanes), lambda i: (i, 0)),
        ),
        compiler_params=pltpu.CompilerParams(
            dimension_semantics=("parallel",),
            vmem_limit_bytes=_VMEM_LIMIT_BYTES,
        ),
    )(x2d)


def cola_model_baseline_forward(params, x):
    """Equivalent of COLA_model_baseline.forward: returns x unchanged.

    `params` (the module's unused nn.Linear(1, 1)) are accepted and ignored,
    mirroring the PyTorch module's forward, which never applies them.
    """
    del params  # never used in forward, matching the PyTorch module
    n = x.size
    if n == 0:
        return x

    itemsize = jnp.dtype(x.dtype).itemsize
    layout = _choose_layout(n, itemsize)
    if layout is None:
        # Forward is identity; skipping the copy is exact (and optimal) when
        # no lane-aligned tiling exists for an awkward size.
        return x

    rows, lanes, block_rows = layout
    y2d = _identity_copy(jnp.reshape(x, (rows, lanes)), block_rows)
    return jnp.reshape(y2d, x.shape)


if __name__ == "__main__":
    params = init_params()

    key = jax.random.PRNGKey(0)
    # Small NCHW input consistent with a conv-style model input.
    x = jax.random.normal(key, (2, 4, 16, 16), dtype=jnp.float32)

    y = cola_model_baseline_forward(params, x)
    y = jax.block_until_ready(y)

    # Sanity check: forward is identity (bitwise).
    assert y.shape == x.shape and y.dtype == x.dtype
    assert bool(jnp.array_equal(y, x))

    print("KERNEL_OK")
</pallas_src>

<mosaic_0001>
module attributes {stable_mosaic.version = 11 : i64} {
  func.func @_identity_kernel(%arg0: i32, %arg1: memref<1x2048xf32, #tpu.memory_space<vmem>>, %arg2: memref<1x2048xf32, #tpu.memory_space<vmem>>) attributes {dimension_semantics = [#tpu.dimension_semantics<parallel>], iteration_bounds = array<i64: 1>, scalar_prefetch = 0 : i64, scratch_operands = 0 : i64, tpu.core_type = #tpu.core_type<tc>, window_params = [{transform_indices = @transform_0, window_bounds = array<i64: 1, 2048>}, {transform_indices = @transform_1, window_bounds = array<i64: 1, 2048>}]} {
    %c0 = arith.constant 0 : index
    %c0_0 = arith.constant 0 : index
    %0 = vector.load %arg1[%c0, %c0_0] : memref<1x2048xf32, #tpu.memory_space<vmem>>, vector<1x2048xf32>
    %c0_1 = arith.constant 0 : index
    %c0_2 = arith.constant 0 : index
    %1 = vector.load %arg2[%c0_1, %c0_2] : memref<1x2048xf32, #tpu.memory_space<vmem>>, vector<1x2048xf32>
    tpu.vector_store %arg2[%c0_1, %c0_2], %0 {strides = array<i32>} : memref<1x2048xf32, #tpu.memory_space<vmem>>, vector<1x2048xf32>,
    return
  }
  func.func @transform_0(%arg0: i32) -> (i32, i32) {
    %c0_i32 = arith.constant 0 : i32
    %c0_i32_0 = arith.constant 0 : i32
    return %arg0, %c0_i32 : i32, i32
  }
  func.func @transform_1(%arg0: i32) -> (i32, i32) {
    %c0_i32 = arith.constant 0 : i32
    %c0_i32_0 = arith.constant 0 : i32
    return %arg0, %c0_i32 : i32, i32
  }
}

</mosaic_0001>

<llo_original>
// kernel: tpu_custom_call.1
$region0: #{tpu_custom_call.1}
  #allocation0 [shape = 'u32[]', space=smem, size = 0x4, offset = 0x4, fixed_abs, tag = 'smem constant byte address 0x4 - core index']
  #allocation1 [shape = 'u32[72,128]{1,0:T(1,128)}', space=vmem, size = 0x9000, scoped, tag = 'internal scratch']
  %s0 = inlined_call_operand.hbm [shape: f32[1,2048], index: 0, kind: input, shape index: {}]
  %s1 = inlined_call_operand.hbm [shape: f32[1,2048], index: 1, kind: output, shape index: {}]
  %s2 = sld [smem:[#allocation0]]
  $region18: #{tpu_custom_call.1} parent=0
    _
  %s4 = ssub.s32 1, %s2
  %s5 = scalar_select 0, %s4, %s2
  $region1: #{tpu_custom_call.1} parent=0
    #allocation2 [shape = 'u8[8192]{0}', space=vmem, size = 0x2000, scoped, tag = 'input window, operand 0, single buffered']
    #allocation3 [shape = 's32[1]{0}', space=sflag, size = 0x4, scoped, tag = 'scoped memory for tpu_custom_call.1']
    #allocation4 [shape = 's32[1]{0}', space=sflag, size = 0x4, scoped, tag = 'scoped memory for tpu_custom_call.1']
    #allocation5 [shape = 'u8[8192]{0}', space=vmem, size = 0x2000, scoped, tag = 'output window, operand 0, single buffered']
    %6 = vsyncpa [#allocation3], 0
    %7 = vsyncpa [#allocation4], 0
    // Predicated region
    $region2: #{tpu_custom_call.1} parent=1 // pred_check
      _
    $region3: #{tpu_custom_call.1} parent=1 // pred_check_branch
      %9 = sbr.rel (0) target = $region5
    $region4: #{tpu_custom_call.1} parent=1 // pred_region
      %11 = vsyncadd [#allocation3], 0
      %s13 = sshll.u32 %s0, 4
      %s14 = int_to_ptr.hbm [resolvable:$true] %s13
      %s15 = sshll.u32 [#allocation2], 4
      %s16 = int_to_ptr.vmem [resolvable:$true] %s15
      %18 = dma.hbm_to_vmem [thread:$0]  %s14, 256, %s16, [#allocation3]
    $region5: #{tpu_custom_call.1} parent=1 // pred_fallthru
      _
    // Predicated region
    $region6: #{tpu_custom_call.1} parent=1 // pred_check
      _
    $region7: #{tpu_custom_call.1} parent=1 // pred_check_branch
      %20 = sbr.rel (0) target = $region9
    $region8: #{tpu_custom_call.1} parent=1 // pred_region
      %22 = dma.done [#allocation3], 256
    $region9: #{tpu_custom_call.1} parent=1 // pred_fallthru
      _
    %v23 = vld [vmem:[#allocation2] sm:$0xff]
    %v24 = vld [vmem:[#allocation2 + $0x8] sm:$0xff]
    %25 = vst [vmem:[#allocation5] sm:$0xff] %v23
    %26 = vst [vmem:[#allocation5 + $0x8] sm:$0xff] %v24
    // Predicated region
    $region10: #{tpu_custom_call.1} parent=1 // pred_check
      _
    $region11: #{tpu_custom_call.1} parent=1 // pred_check_branch
      %28 = sbr.rel (0) target = $region13
    $region12: #{tpu_custom_call.1} parent=1 // pred_region
      %30 = vsyncadd [#allocation4], 0
      %s32 = sshll.u32 [#allocation5], 4
      %s33 = int_to_ptr.vmem [resolvable:$true] %s32
      %s34 = sshll.u32 %s1, 4
      %s35 = int_to_ptr.hbm [resolvable:$true] %s34
      %37 = dma.vmem_to_hbm [thread:$0]  %s33, 256, %s35, [#allocation4]
    $region13: #{tpu_custom_call.1} parent=1 // pred_fallthru
      _
    // Predicated region
    $region14: #{tpu_custom_call.1} parent=1 // pred_check
      _
    $region15: #{tpu_custom_call.1} parent=1 // pred_check_branch
      %39 = sbr.rel (0) target = $region17
    $region16: #{tpu_custom_call.1} parent=1 // pred_region
      %41 = dma.done [#allocation4], 256
    $region17: #{tpu_custom_call.1} parent=1 // pred_fallthru
      _
    %42 = vsyncpa [#allocation3], 1
    %43 = vsyncpa [#allocation4], 1

</llo_original>
